<compile_context>
chip_gen: v5e
topology: v5e:2x2
jax: 0.10.0
libtpu: 0.0.40
codegen_flags: <defaults>
</compile_context>

<pallas_src>
import functools

import jax
import jax.numpy as jnp
import numpy as np
from jax.experimental import pallas as pl
from jax.experimental.pallas import tpu as pltpu

EPS = 1e-5

# 3x3 tap order (kh = dh+1, kw = dw+1)  ->  tap index t = kh*3 + kw
_OFFS_3X3 = [(dh, dw) for dh in (-1, 0, 1) for dw in (-1, 0, 1)]


def _elu(x):
    # ELU(alpha=1).  exp(min(x,0)) - 1 instead of expm1 (guaranteed Mosaic/EUP lowering;
    # the precision difference is far below the test tolerance).
    return jnp.where(x > 0, x, jnp.exp(jnp.minimum(x, 0.0)) - 1.0)


def _endblock_kernel(H, W,
                     x_ref, masks_ref,
                     w1_ref, g1_ref, b1_ref,
                     w2_ref, g2_ref, b2_ref,
                     w3_ref, b3_ref, ident_ref,
                     out_ref):
    """All tensors are (channels, flat-spatial) with flat-spatial on the lane axis.

    x_ref    : (C, S)  f32,  S = N*H*W  (no spatial padding anywhere)
    masks_ref: (8, S)  f32   0/1 boundary masks for the 8 non-center 3x3 taps
    w1/w2    : (C, 9C) bf16  im2col-packed 3x3 weights (rows: tap kh*3+kw, then c_in)
    w3       : (C, 6C) bf16  im2col-packed (2,3) weights
    g*/b*    : (C, 1)  f32   BN affine params;   b3_ref: conv3 bias (C, 1)
    ident_ref: (C, S)  f32   x[:, :, 0, 0] broadcast over the flat spatial axis
    out_ref  : (C, S)  f32   dense (stride-1) conv3+bias+identity+ELU response; the
                             stride-2 valid-window subsample happens in the wrapper.
    """
    S = x_ref.shape[1]
    masks = masks_ref[...]                                             # (8, S) f32

    def im2col_3x3(v):
        """(C, S) f32 -> (9C, S) bf16: 9 lane-rolled, boundary-masked taps on sublanes.

        Each tap is masked and cast to bf16 as it is produced so at most one extra f32
        tap is live at a time (keeps the 9-tap prologue within the 64-vreg budget).
        """
        taps = []
        mrow = 0
        for dh, dw in _OFFS_3X3:
            d = dh * W + dw                          # flat lane shift of tap (dh, dw)
            tap = v if d == 0 else pltpu.roll(v, (-d) % S, 1)
            if (dh, dw) != (0, 0):
                tap = tap * masks[mrow:mrow + 1, :]  # zero out wrapped / out-of-image
                mrow += 1
            taps.append(tap.astype(jnp.bfloat16))
        return jnp.concatenate(taps, axis=0)

    def bn_elu(acc, g, b):
        """Training-mode BN (one-pass biased batch stats) folded to scale/shift + ELU."""
        inv_n = 1.0 / S
        mu = jnp.sum(acc, axis=1, keepdims=True) * inv_n               # (C, 1)
        ex2 = jnp.sum(acc * acc, axis=1, keepdims=True) * inv_n
        var = jnp.maximum(ex2 - mu * mu, 0.0)
        scale = g * jax.lax.rsqrt(var + EPS)                           # (C, 1)
        shift = b - scale * mu                                         # (C, 1)
        return _elu(acc * scale + shift)                               # 2 wide VALU ops

    # ---- conv1 (3x3, pad 1) + bn1 + ELU : one (C,9C) x (9C,S) bf16 MXU matmul ----
    acc1 = jnp.dot(w1_ref[...], im2col_3x3(x_ref[...]),
                   preferred_element_type=jnp.float32)
    y1 = bn_elu(acc1, g1_ref[...], b1_ref[...])

    # ---- conv2 (3x3, pad 1) + bn2 + ELU ----
    acc2 = jnp.dot(w2_ref[...], im2col_3x3(y1),
                   preferred_element_type=jnp.float32)
    y2 = bn_elu(acc2, g2_ref[...], b2_ref[...])

    # ---- conv3 (2x3, stride 2, pad 0): dense stride-1 response from 6 rolled taps ----
    # Valid stride-2 output positions (h = 2*oh <= H-2, w = 2*ow <= W-3) never read a
    # wrapped tap, so no masking is needed; positions discarded by the wrapper slice may
    # hold garbage but never contaminate valid columns (im2col columns are independent).
    taps3 = []
    for kh in range(2):
        for kw in range(3):
            d = kh * W + kw
            tap = y2 if d == 0 else pltpu.roll(y2, (-d) % S, 1)
            taps3.append(tap.astype(jnp.bfloat16))
    im3 = jnp.concatenate(taps3, axis=0)                               # (6C, S) bf16
    dense3 = jnp.dot(w3_ref[...], im3, preferred_element_type=jnp.float32)  # (C, S)

    # ---- + conv3 bias, + Upsample((1,1)) identity, ELU, single lane-dense slab store ----
    out_ref[...] = _elu(dense3 + b3_ref[...] + ident_ref[...])


def pack_params(p, N, H, W):
    """One-time packing of parameters + shape-derived constants (call once at init)."""
    C = p["w1"].shape[3]
    # im2col-packed bf16 weights: row block t = kh*KW + kw holds the c_in -> c_out slice.
    w1r = jnp.transpose(p["w1"], (3, 0, 1, 2)).reshape(C, 9 * C).astype(jnp.bfloat16)
    w2r = jnp.transpose(p["w2"], (3, 0, 1, 2)).reshape(C, 9 * C).astype(jnp.bfloat16)
    w3r = jnp.transpose(p["w3"], (3, 0, 1, 2)).reshape(C, 6 * C).astype(jnp.bfloat16)

    # Boundary masks for the 8 non-center 3x3 taps, flattened per image and tiled over N.
    h = np.arange(H)[:, None]
    w = np.arange(W)[None, :]
    rows = []
    for dh, dw in _OFFS_3X3:
        if (dh, dw) == (0, 0):
            continue
        valid = (h + dh >= 0) & (h + dh < H) & (w + dw >= 0) & (w + dw < W)
        rows.append(valid.reshape(-1))
    masks = np.tile(np.stack(rows).astype(np.float32), (1, N))          # (8, N*H*W)

    return dict(
        w1r=w1r, w2r=w2r, w3r=w3r,
        g1=p["g1"].reshape(C, 1).astype(jnp.float32),
        b1=p["b1"].reshape(C, 1).astype(jnp.float32),
        g2=p["g2"].reshape(C, 1).astype(jnp.float32),
        b2=p["b2"].reshape(C, 1).astype(jnp.float32),
        b3=p["b3"].reshape(C, 1).astype(jnp.float32),
        masks=jnp.asarray(masks),
    )


def _endblock_forward(x_nchw, packed):
    """x_nchw: (N, C, H, W) float32, C == inplanes == planes.  Call via jit (below)."""
    N, C, H, W = x_nchw.shape
    assert H >= 2 and W >= 3, "need H >= 2 and W >= 3"
    H3 = (H - 2) // 2 + 1
    W3 = (W - 3) // 2 + 1
    S = N * H * W

    # Channels-on-sublanes / flat-spatial-on-lanes working layout.  Single interface
    # transpose; no HBM zero-pad round trip (padding handled by precomputed masks).
    x_flat = jnp.transpose(x_nchw, (1, 0, 2, 3)).reshape(C, S).astype(jnp.float32)

    # Upsample((1,1)) identity == x[:, :, 0, 0], broadcast over the flat spatial axis.
    ident = jnp.transpose(x_nchw[:, :, 0, 0]).astype(jnp.float32)       # (C, N)
    ident_s = jnp.broadcast_to(ident[:, :, None], (C, N, H * W)).reshape(C, S)

    kernel = functools.partial(_endblock_kernel, H, W)
    vmem = pl.BlockSpec(memory_space=pltpu.MemorySpace.VMEM)
    cost = pl.CostEstimate(
        flops=int(2 * C * C * S * (9 + 9 + 6)),
        transcendentals=int(3 * C * S + 2 * C),
        bytes_accessed=int((3 * C * S + 8 * S + 5 * C) * 4 + 24 * C * C * 2),
    )

    # TODO(synk): for large inputs, add an N/H-tiled grid marked "parallel" (v7x: 2
    # TensorCores, 64 MiB VMEM) with a two-pass / cross-step accumulation for the
    # training-mode BN batch statistics; at this problem size a single grid point and
    # the default scoped-VMEM limit (<1 MiB used) are optimal.
    out_full = pl.pallas_call(
        kernel,
        out_shape=jax.ShapeDtypeStruct((C, S), jnp.float32),
        in_specs=[vmem] * 11,
        out_specs=vmem,
        cost_estimate=cost,
    )(x_flat, packed["masks"],
      packed["w1r"], packed["g1"], packed["b1"],
      packed["w2r"], packed["g2"], packed["b2"],
      packed["w3r"], packed["b3"], ident_s)

    # Stride-2 / valid-window subsample of the dense conv3 response (cheap strided slice,
    # fuses with the final transpose under jit), then back to NCHW.
    out = out_full.reshape(C, N, H, W)[:, :, 0:2 * H3:2, 0:2 * W3:2]    # (C, N, H3, W3)
    return jnp.transpose(out, (1, 0, 2, 3))


endblock_forward = jax.jit(_endblock_forward)


def init_params(key, C):
    ks = jax.random.split(key, 8)
    return dict(
        w1=jax.random.normal(ks[0], (3, 3, C, C), jnp.float32) * 0.1,  # HWIO
        w2=jax.random.normal(ks[1], (3, 3, C, C), jnp.float32) * 0.1,  # HWIO
        w3=jax.random.normal(ks[2], (2, 3, C, C), jnp.float32) * 0.1,  # HWIO
        b3=jax.random.normal(ks[3], (C,), jnp.float32) * 0.1,
        g1=1.0 + 0.1 * jax.random.normal(ks[4], (C,), jnp.float32),
        b1=0.1 * jax.random.normal(ks[5], (C,), jnp.float32),
        g2=1.0 + 0.1 * jax.random.normal(ks[6], (C,), jnp.float32),
        b2=0.1 * jax.random.normal(ks[7], (C,), jnp.float32),
    )


def ref_forward(x_nchw, p):
    """Pure-JAX f32 reference (same semantics) for validation."""
    x = jnp.transpose(x_nchw, (0, 2, 3, 1)).astype(jnp.float32)

    def conv(v, w, pad, stride):
        return jax.lax.conv_general_dilated(
            v, w, window_strides=stride, padding=pad,
            dimension_numbers=("NHWC", "HWIO", "NHWC"))

    def bn(v, g, b):
        mu = jnp.mean(v, axis=(0, 1, 2), keepdims=True)
        var = jnp.mean((v - mu) ** 2, axis=(0, 1, 2), keepdims=True)
        return g * (v - mu) * jax.lax.rsqrt(var + EPS) + b

    y = _elu(bn(conv(x, p["w1"], [(1, 1), (1, 1)], (1, 1)), p["g1"], p["b1"]))
    y = _elu(bn(conv(y, p["w2"], [(1, 1), (1, 1)], (1, 1)), p["g2"], p["b2"]))
    y = conv(y, p["w3"], [(0, 0), (0, 0)], (2, 2)) + p["b3"]
    y = _elu(y + x[:, 0:1, 0:1, :])                                     # Upsample((1,1))
    return jnp.transpose(y, (0, 3, 1, 2))


if __name__ == "__main__":
    key = jax.random.PRNGKey(0)
    kx, kp = jax.random.split(key)

    # inplanes == planes == 8 (required for the original forward to be well-formed)
    N, C, H, W = 2, 8, 16, 16
    x = jax.random.normal(kx, (N, C, H, W), jnp.float32)
    params = init_params(kp, C)

    packed = pack_params(params, N, H, W)      # one-time packing, off the per-call path

    out = endblock_forward(x, packed)
    out = jax.block_until_ready(out)

    H3, W3 = (H - 2) // 2 + 1, (W - 3) // 2 + 1
    assert out.shape == (N, C, H3, W3), out.shape
    assert bool(jnp.all(jnp.isfinite(out)))

    ref = ref_forward(x, params)
    np.testing.assert_allclose(np.asarray(out), np.asarray(ref), rtol=3e-2, atol=3e-2)

    print("KERNEL_OK")
</pallas_src>

<mosaic_0001>
module attributes {stable_mosaic.version = 11 : i64} {
  func.func @_endblock_kernel(%arg0: memref<8x512xf32, #tpu.memory_space<vmem>>, %arg1: memref<8x512xf32, #tpu.memory_space<vmem>>, %arg2: memref<8x72xbf16, #tpu.memory_space<vmem>>, %arg3: memref<8x1xf32, #tpu.memory_space<vmem>>, %arg4: memref<8x1xf32, #tpu.memory_space<vmem>>, %arg5: memref<8x72xbf16, #tpu.memory_space<vmem>>, %arg6: memref<8x1xf32, #tpu.memory_space<vmem>>, %arg7: memref<8x1xf32, #tpu.memory_space<vmem>>, %arg8: memref<8x48xbf16, #tpu.memory_space<vmem>>, %arg9: memref<8x1xf32, #tpu.memory_space<vmem>>, %arg10: memref<8x512xf32, #tpu.memory_space<vmem>>, %arg11: memref<8x512xf32, #tpu.memory_space<vmem>>) attributes {dimension_semantics = [], scalar_prefetch = 0 : i64, scratch_operands = 0 : i64, tpu.core_type = #tpu.core_type<tc>} {
    %c0 = arith.constant 0 : index
    %c0_0 = arith.constant 0 : index
    %0 = vector.load %arg1[%c0, %c0_0] : memref<8x512xf32, #tpu.memory_space<vmem>>, vector<8x512xf32>
    %c0_1 = arith.constant 0 : index
    %c0_2 = arith.constant 0 : index
    %1 = vector.load %arg2[%c0_1, %c0_2] : memref<8x72xbf16, #tpu.memory_space<vmem>>, vector<8x72xbf16>
    %c0_3 = arith.constant 0 : index
    %c0_4 = arith.constant 0 : index
    %2 = vector.load %arg0[%c0_3, %c0_4] : memref<8x512xf32, #tpu.memory_space<vmem>>, vector<8x512xf32>
    %c17_i32 = arith.constant 17 : i32
    %3 = tpu.dynamic_rotate %2 by %c17_i32 dim 1 : vector<8x512xf32>, i32 -> vector<8x512xf32>
    %4 = vector.extract_strided_slice %0 {offsets = [0, 0], sizes = [1, 512], strides = [1, 1]} : vector<8x512xf32> to vector<1x512xf32>
    %5 = vector.broadcast %4 : vector<1x512xf32> to vector<8x512xf32>
    %6 = arith.mulf %3, %5 : vector<8x512xf32>
    %7 = arith.truncf %6 : vector<8x512xf32> to vector<8x512xbf16>
    %c16_i32 = arith.constant 16 : i32
    %8 = tpu.dynamic_rotate %2 by %c16_i32 dim 1 : vector<8x512xf32>, i32 -> vector<8x512xf32>
    %9 = vector.extract_strided_slice %0 {offsets = [1, 0], sizes = [1, 512], strides = [1, 1]} : vector<8x512xf32> to vector<1x512xf32>
    %10 = vector.broadcast %9 : vector<1x512xf32> to vector<8x512xf32>
    %11 = arith.mulf %8, %10 : vector<8x512xf32>
    %12 = arith.truncf %11 : vector<8x512xf32> to vector<8x512xbf16>
    %c15_i32 = arith.constant 15 : i32
    %13 = tpu.dynamic_rotate %2 by %c15_i32 dim 1 : vector<8x512xf32>, i32 -> vector<8x512xf32>
    %14 = vector.extract_strided_slice %0 {offsets = [2, 0], sizes = [1, 512], strides = [1, 1]} : vector<8x512xf32> to vector<1x512xf32>
    %15 = vector.broadcast %14 : vector<1x512xf32> to vector<8x512xf32>
    %16 = arith.mulf %13, %15 : vector<8x512xf32>
    %17 = arith.truncf %16 : vector<8x512xf32> to vector<8x512xbf16>
    %c1_i32 = arith.constant 1 : i32
    %18 = tpu.dynamic_rotate %2 by %c1_i32 dim 1 : vector<8x512xf32>, i32 -> vector<8x512xf32>
    %19 = vector.extract_strided_slice %0 {offsets = [3, 0], sizes = [1, 512], strides = [1, 1]} : vector<8x512xf32> to vector<1x512xf32>
    %20 = vector.broadcast %19 : vector<1x512xf32> to vector<8x512xf32>
    %21 = arith.mulf %18, %20 : vector<8x512xf32>
    %22 = arith.truncf %21 : vector<8x512xf32> to vector<8x512xbf16>
    %23 = arith.truncf %2 : vector<8x512xf32> to vector<8x512xbf16>
    %c511_i32 = arith.constant 511 : i32
    %24 = tpu.dynamic_rotate %2 by %c511_i32 dim 1 : vector<8x512xf32>, i32 -> vector<8x512xf32>
    %25 = vector.extract_strided_slice %0 {offsets = [4, 0], sizes = [1, 512], strides = [1, 1]} : vector<8x512xf32> to vector<1x512xf32>
    %26 = vector.broadcast %25 : vector<1x512xf32> to vector<8x512xf32>
    %27 = arith.mulf %24, %26 : vector<8x512xf32>
    %28 = arith.truncf %27 : vector<8x512xf32> to vector<8x512xbf16>
    %c497_i32 = arith.constant 497 : i32
    %29 = tpu.dynamic_rotate %2 by %c497_i32 dim 1 : vector<8x512xf32>, i32 -> vector<8x512xf32>
    %30 = vector.extract_strided_slice %0 {offsets = [5, 0], sizes = [1, 512], strides = [1, 1]} : vector<8x512xf32> to vector<1x512xf32>
    %31 = vector.broadcast %30 : vector<1x512xf32> to vector<8x512xf32>
    %32 = arith.mulf %29, %31 : vector<8x512xf32>
    %33 = arith.truncf %32 : vector<8x512xf32> to vector<8x512xbf16>
    %c496_i32 = arith.constant 496 : i32
    %34 = tpu.dynamic_rotate %2 by %c496_i32 dim 1 : vector<8x512xf32>, i32 -> vector<8x512xf32>
    %35 = vector.extract_strided_slice %0 {offsets = [6, 0], sizes = [1, 512], strides = [1, 1]} : vector<8x512xf32> to vector<1x512xf32>
    %36 = vector.broadcast %35 : vector<1x512xf32> to vector<8x512xf32>
    %37 = arith.mulf %34, %36 : vector<8x512xf32>
    %38 = arith.truncf %37 : vector<8x512xf32> to vector<8x512xbf16>
    %c495_i32 = arith.constant 495 : i32
    %39 = tpu.dynamic_rotate %2 by %c495_i32 dim 1 : vector<8x512xf32>, i32 -> vector<8x512xf32>
    %40 = vector.extract_strided_slice %0 {offsets = [7, 0], sizes = [1, 512], strides = [1, 1]} : vector<8x512xf32> to vector<1x512xf32>
    %41 = vector.broadcast %40 : vector<1x512xf32> to vector<8x512xf32>
    %42 = arith.mulf %39, %41 : vector<8x512xf32>
    %43 = arith.truncf %42 : vector<8x512xf32> to vector<8x512xbf16>
    %44 = tpu.concatenate %7, %12, %17, %22, %23, %28, %33, %38, %43 in 0 : vector<8x512xbf16>, vector<8x512xbf16>, vector<8x512xbf16>, vector<8x512xbf16>, vector<8x512xbf16>, vector<8x512xbf16>, vector<8x512xbf16>, vector<8x512xbf16>, vector<8x512xbf16> -> vector<72x512xbf16>
    %cst = arith.constant dense<0.000000e+00> : vector<8x512xf32>
    %45 = tpu.matmul %1, %44, %cst {dimension_numbers = #tpu.dot_dimension_numbers<[1], [0], [0], [1], [0, 0, 1, 1], [], []>} : vector<8x72xbf16>, vector<72x512xbf16>, vector<8x512xf32> -> vector<8x512xf32>
    %c0_5 = arith.constant 0 : index
    %c0_6 = arith.constant 0 : index
    %46 = vector.load %arg3[%c0_5, %c0_6] : memref<8x1xf32, #tpu.memory_space<vmem>>, vector<8x1xf32>
    %c0_7 = arith.constant 0 : index
    %c0_8 = arith.constant 0 : index
    %47 = vector.load %arg4[%c0_7, %c0_8] : memref<8x1xf32, #tpu.memory_space<vmem>>, vector<8x1xf32>
    %cst_9 = arith.constant dense<0.000000e+00> : vector<8xf32>
    %48 = vector.multi_reduction <add>, %45, %cst_9 [1] : vector<8x512xf32> to vector<8xf32>
    %49 = vector.shape_cast %48 : vector<8xf32> to vector<8x1xf32>
    %cst_10 = arith.constant 0.001953125 : f32
    %50 = vector.broadcast %cst_10 : f32 to vector<8x1xf32>
    %51 = arith.mulf %49, %50 : vector<8x1xf32>
    %52 = arith.mulf %45, %45 : vector<8x512xf32>
    %cst_11 = arith.constant dense<0.000000e+00> : vector<8xf32>
    %53 = vector.multi_reduction <add>, %52, %cst_11 [1] : vector<8x512xf32> to vector<8xf32>
    %54 = vector.shape_cast %53 : vector<8xf32> to vector<8x1xf32>
    %cst_12 = arith.constant 0.001953125 : f32
    %55 = vector.broadcast %cst_12 : f32 to vector<8x1xf32>
    %56 = arith.mulf %54, %55 : vector<8x1xf32>
    %57 = arith.mulf %51, %51 : vector<8x1xf32>
    %58 = arith.subf %56, %57 : vector<8x1xf32>
    %cst_13 = arith.constant 0.000000e+00 : f32
    %59 = vector.broadcast %cst_13 : f32 to vector<8x1xf32>
    %60 = arith.maximumf %58, %59 : vector<8x1xf32>
    %cst_14 = arith.constant 9.99999974E-6 : f32
    %61 = vector.broadcast %cst_14 : f32 to vector<8x1xf32>
    %62 = arith.addf %60, %61 : vector<8x1xf32>
    %63 = math.rsqrt %62 : vector<8x1xf32>
    %64 = arith.mulf %46, %63 : vector<8x1xf32>
    %65 = arith.mulf %64, %51 : vector<8x1xf32>
    %66 = arith.subf %47, %65 : vector<8x1xf32>
    %67 = vector.broadcast %64 : vector<8x1xf32> to vector<8x512xf32>
    %68 = arith.mulf %45, %67 : vector<8x512xf32>
    %69 = vector.broadcast %66 : vector<8x1xf32> to vector<8x512xf32>
    %70 = arith.addf %68, %69 : vector<8x512xf32>
    %cst_15 = arith.constant 0.000000e+00 : f32
    %71 = vector.broadcast %cst_15 : f32 to vector<8x512xf32>
    %72 = arith.cmpf ogt, %70, %71 : vector<8x512xf32>
    %cst_16 = arith.constant 0.000000e+00 : f32
    %73 = vector.broadcast %cst_16 : f32 to vector<8x512xf32>
    %74 = arith.minimumf %70, %73 : vector<8x512xf32>
    %75 = math.exp %74 : vector<8x512xf32>
    %cst_17 = arith.constant 1.000000e+00 : f32
    %76 = vector.broadcast %cst_17 : f32 to vector<8x512xf32>
    %77 = arith.subf %75, %76 : vector<8x512xf32>
    %78 = arith.select %72, %70, %77 : vector<8x512xi1>, vector<8x512xf32>
    %c0_18 = arith.constant 0 : index
    %c0_19 = arith.constant 0 : index
    %79 = vector.load %arg5[%c0_18, %c0_19] : memref<8x72xbf16, #tpu.memory_space<vmem>>, vector<8x72xbf16>
    %c17_i32_20 = arith.constant 17 : i32
    %80 = tpu.dynamic_rotate %78 by %c17_i32_20 dim 1 : vector<8x512xf32>, i32 -> vector<8x512xf32>
    %81 = vector.extract_strided_slice %0 {offsets = [0, 0], sizes = [1, 512], strides = [1, 1]} : vector<8x512xf32> to vector<1x512xf32>
    %82 = vector.broadcast %81 : vector<1x512xf32> to vector<8x512xf32>
    %83 = arith.mulf %80, %82 : vector<8x512xf32>
    %84 = arith.truncf %83 : vector<8x512xf32> to vector<8x512xbf16>
    %c16_i32_21 = arith.constant 16 : i32
    %85 = tpu.dynamic_rotate %78 by %c16_i32_21 dim 1 : vector<8x512xf32>, i32 -> vector<8x512xf32>
    %86 = vector.extract_strided_slice %0 {offsets = [1, 0], sizes = [1, 512], strides = [1, 1]} : vector<8x512xf32> to vector<1x512xf32>
    %87 = vector.broadcast %86 : vector<1x512xf32> to vector<8x512xf32>
    %88 = arith.mulf %85, %87 : vector<8x512xf32>
    %89 = arith.truncf %88 : vector<8x512xf32> to vector<8x512xbf16>
    %c15_i32_22 = arith.constant 15 : i32
    %90 = tpu.dynamic_rotate %78 by %c15_i32_22 dim 1 : vector<8x512xf32>, i32 -> vector<8x512xf32>
    %91 = vector.extract_strided_slice %0 {offsets = [2, 0], sizes = [1, 512], strides = [1, 1]} : vector<8x512xf32> to vector<1x512xf32>
    %92 = vector.broadcast %91 : vector<1x512xf32> to vector<8x512xf32>
    %93 = arith.mulf %90, %92 : vector<8x512xf32>
    %94 = arith.truncf %93 : vector<8x512xf32> to vector<8x512xbf16>
    %c1_i32_23 = arith.constant 1 : i32
    %95 = tpu.dynamic_rotate %78 by %c1_i32_23 dim 1 : vector<8x512xf32>, i32 -> vector<8x512xf32>
    %96 = vector.extract_strided_slice %0 {offsets = [3, 0], sizes = [1, 512], strides = [1, 1]} : vector<8x512xf32> to vector<1x512xf32>
    %97 = vector.broadcast %96 : vector<1x512xf32> to vector<8x512xf32>
    %98 = arith.mulf %95, %97 : vector<8x512xf32>
    %99 = arith.truncf %98 : vector<8x512xf32> to vector<8x512xbf16>
    %100 = arith.truncf %78 : vector<8x512xf32> to vector<8x512xbf16>
    %c511_i32_24 = arith.constant 511 : i32
    %101 = tpu.dynamic_rotate %78 by %c511_i32_24 dim 1 : vector<8x512xf32>, i32 -> vector<8x512xf32>
    %102 = vector.extract_strided_slice %0 {offsets = [4, 0], sizes = [1, 512], strides = [1, 1]} : vector<8x512xf32> to vector<1x512xf32>
    %103 = vector.broadcast %102 : vector<1x512xf32> to vector<8x512xf32>
    %104 = arith.mulf %101, %103 : vector<8x512xf32>
    %105 = arith.truncf %104 : vector<8x512xf32> to vector<8x512xbf16>
    %c497_i32_25 = arith.constant 497 : i32
    %106 = tpu.dynamic_rotate %78 by %c497_i32_25 dim 1 : vector<8x512xf32>, i32 -> vector<8x512xf32>
    %107 = vector.extract_strided_slice %0 {offsets = [5, 0], sizes = [1, 512], strides = [1, 1]} : vector<8x512xf32> to vector<1x512xf32>
    %108 = vector.broadcast %107 : vector<1x512xf32> to vector<8x512xf32>
    %109 = arith.mulf %106, %108 : vector<8x512xf32>
    %110 = arith.truncf %109 : vector<8x512xf32> to vector<8x512xbf16>
    %c496_i32_26 = arith.constant 496 : i32
    %111 = tpu.dynamic_rotate %78 by %c496_i32_26 dim 1 : vector<8x512xf32>, i32 -> vector<8x512xf32>
    %112 = vector.extract_strided_slice %0 {offsets = [6, 0], sizes = [1, 512], strides = [1, 1]} : vector<8x512xf32> to vector<1x512xf32>
    %113 = vector.broadcast %112 : vector<1x512xf32> to vector<8x512xf32>
    %114 = arith.mulf %111, %113 : vector<8x512xf32>
    %115 = arith.truncf %114 : vector<8x512xf32> to vector<8x512xbf16>
    %c495_i32_27 = arith.constant 495 : i32
    %116 = tpu.dynamic_rotate %78 by %c495_i32_27 dim 1 : vector<8x512xf32>, i32 -> vector<8x512xf32>
    %117 = vector.extract_strided_slice %0 {offsets = [7, 0], sizes = [1, 512], strides = [1, 1]} : vector<8x512xf32> to vector<1x512xf32>
    %118 = vector.broadcast %117 : vector<1x512xf32> to vector<8x512xf32>
    %119 = arith.mulf %116, %118 : vector<8x512xf32>
    %120 = arith.truncf %119 : vector<8x512xf32> to vector<8x512xbf16>
    %121 = tpu.concatenate %84, %89, %94, %99, %100, %105, %110, %115, %120 in 0 : vector<8x512xbf16>, vector<8x512xbf16>, vector<8x512xbf16>, vector<8x512xbf16>, vector<8x512xbf16>, vector<8x512xbf16>, vector<8x512xbf16>, vector<8x512xbf16>, vector<8x512xbf16> -> vector<72x512xbf16>
    %cst_28 = arith.constant dense<0.000000e+00> : vector<8x512xf32>
    %122 = tpu.matmul %79, %121, %cst_28 {dimension_numbers = #tpu.dot_dimension_numbers<[1], [0], [0], [1], [0, 0, 1, 1], [], []>} : vector<8x72xbf16>, vector<72x512xbf16>, vector<8x512xf32> -> vector<8x512xf32>
    %c0_29 = arith.constant 0 : index
    %c0_30 = arith.constant 0 : index
    %123 = vector.load %arg6[%c0_29, %c0_30] : memref<8x1xf32, #tpu.memory_space<vmem>>, vector<8x1xf32>
    %c0_31 = arith.constant 0 : index
    %c0_32 = arith.constant 0 : index
    %124 = vector.load %arg7[%c0_31, %c0_32] : memref<8x1xf32, #tpu.memory_space<vmem>>, vector<8x1xf32>
    %cst_33 = arith.constant dense<0.000000e+00> : vector<8xf32>
    %125 = vector.multi_reduction <add>, %122, %cst_33 [1] : vector<8x512xf32> to vector<8xf32>
    %126 = vector.shape_cast %125 : vector<8xf32> to vector<8x1xf32>
    %cst_34 = arith.constant 0.001953125 : f32
    %127 = vector.broadcast %cst_34 : f32 to vector<8x1xf32>
    %128 = arith.mulf %126, %127 : vector<8x1xf32>
    %129 = arith.mulf %122, %122 : vector<8x512xf32>
    %cst_35 = arith.constant dense<0.000000e+00> : vector<8xf32>
    %130 = vector.multi_reduction <add>, %129, %cst_35 [1] : vector<8x512xf32> to vector<8xf32>
    %131 = vector.shape_cast %130 : vector<8xf32> to vector<8x1xf32>
    %cst_36 = arith.constant 0.001953125 : f32
    %132 = vector.broadcast %cst_36 : f32 to vector<8x1xf32>
    %133 = arith.mulf %131, %132 : vector<8x1xf32>
    %134 = arith.mulf %128, %128 : vector<8x1xf32>
    %135 = arith.subf %133, %134 : vector<8x1xf32>
    %cst_37 = arith.constant 0.000000e+00 : f32
    %136 = vector.broadcast %cst_37 : f32 to vector<8x1xf32>
    %137 = arith.maximumf %135, %136 : vector<8x1xf32>
    %cst_38 = arith.constant 9.99999974E-6 : f32
    %138 = vector.broadcast %cst_38 : f32 to vector<8x1xf32>
    %139 = arith.addf %137, %138 : vector<8x1xf32>
    %140 = math.rsqrt %139 : vector<8x1xf32>
    %141 = arith.mulf %123, %140 : vector<8x1xf32>
    %142 = arith.mulf %141, %128 : vector<8x1xf32>
    %143 = arith.subf %124, %142 : vector<8x1xf32>
    %144 = vector.broadcast %141 : vector<8x1xf32> to vector<8x512xf32>
    %145 = arith.mulf %122, %144 : vector<8x512xf32>
    %146 = vector.broadcast %143 : vector<8x1xf32> to vector<8x512xf32>
    %147 = arith.addf %145, %146 : vector<8x512xf32>
    %cst_39 = arith.constant 0.000000e+00 : f32
    %148 = vector.broadcast %cst_39 : f32 to vector<8x512xf32>
    %149 = arith.cmpf ogt, %147, %148 : vector<8x512xf32>
    %cst_40 = arith.constant 0.000000e+00 : f32
    %150 = vector.broadcast %cst_40 : f32 to vector<8x512xf32>
    %151 = arith.minimumf %147, %150 : vector<8x512xf32>
    %152 = math.exp %151 : vector<8x512xf32>
    %cst_41 = arith.constant 1.000000e+00 : f32
    %153 = vector.broadcast %cst_41 : f32 to vector<8x512xf32>
    %154 = arith.subf %152, %153 : vector<8x512xf32>
    %155 = arith.select %149, %147, %154 : vector<8x512xi1>, vector<8x512xf32>
    %156 = arith.truncf %155 : vector<8x512xf32> to vector<8x512xbf16>
    %c511_i32_42 = arith.constant 511 : i32
    %157 = tpu.dynamic_rotate %155 by %c511_i32_42 dim 1 : vector<8x512xf32>, i32 -> vector<8x512xf32>
    %158 = arith.truncf %157 : vector<8x512xf32> to vector<8x512xbf16>
    %c510_i32 = arith.constant 510 : i32
    %159 = tpu.dynamic_rotate %155 by %c510_i32 dim 1 : vector<8x512xf32>, i32 -> vector<8x512xf32>
    %160 = arith.truncf %159 : vector<8x512xf32> to vector<8x512xbf16>
    %c496_i32_43 = arith.constant 496 : i32
    %161 = tpu.dynamic_rotate %155 by %c496_i32_43 dim 1 : vector<8x512xf32>, i32 -> vector<8x512xf32>
    %162 = arith.truncf %161 : vector<8x512xf32> to vector<8x512xbf16>
    %c495_i32_44 = arith.constant 495 : i32
    %163 = tpu.dynamic_rotate %155 by %c495_i32_44 dim 1 : vector<8x512xf32>, i32 -> vector<8x512xf32>
    %164 = arith.truncf %163 : vector<8x512xf32> to vector<8x512xbf16>
    %c494_i32 = arith.constant 494 : i32
    %165 = tpu.dynamic_rotate %155 by %c494_i32 dim 1 : vector<8x512xf32>, i32 -> vector<8x512xf32>
    %166 = arith.truncf %165 : vector<8x512xf32> to vector<8x512xbf16>
    %167 = tpu.concatenate %156, %158, %160, %162, %164, %166 in 0 : vector<8x512xbf16>, vector<8x512xbf16>, vector<8x512xbf16>, vector<8x512xbf16>, vector<8x512xbf16>, vector<8x512xbf16> -> vector<48x512xbf16>
    %c0_45 = arith.constant 0 : index
    %c0_46 = arith.constant 0 : index
    %168 = vector.load %arg8[%c0_45, %c0_46] : memref<8x48xbf16, #tpu.memory_space<vmem>>, vector<8x48xbf16>
    %cst_47 = arith.constant dense<0.000000e+00> : vector<8x512xf32>
    %169 = tpu.matmul %168, %167, %cst_47 {dimension_numbers = #tpu.dot_dimension_numbers<[1], [0], [0], [1], [0, 0, 1, 1], [], []>} : vector<8x48xbf16>, vector<48x512xbf16>, vector<8x512xf32> -> vector<8x512xf32>
    %c0_48 = arith.constant 0 : index
    %c0_49 = arith.constant 0 : index
    %170 = vector.load %arg9[%c0_48, %c0_49] : memref<8x1xf32, #tpu.memory_space<vmem>>, vector<8x1xf32>
    %171 = vector.broadcast %170 : vector<8x1xf32> to vector<8x512xf32>
    %172 = arith.addf %169, %171 : vector<8x512xf32>
    %c0_50 = arith.constant 0 : index
    %c0_51 = arith.constant 0 : index
    %173 = vector.load %arg10[%c0_50, %c0_51] : memref<8x512xf32, #tpu.memory_space<vmem>>, vector<8x512xf32>
    %174 = arith.addf %172, %173 : vector<8x512xf32>
    %cst_52 = arith.constant 0.000000e+00 : f32
    %175 = vector.broadcast %cst_52 : f32 to vector<8x512xf32>
    %176 = arith.cmpf ogt, %174, %175 : vector<8x512xf32>
    %cst_53 = arith.constant 0.000000e+00 : f32
    %177 = vector.broadcast %cst_53 : f32 to vector<8x512xf32>
    %178 = arith.minimumf %174, %177 : vector<8x512xf32>
    %179 = math.exp %178 : vector<8x512xf32>
    %cst_54 = arith.constant 1.000000e+00 : f32
    %180 = vector.broadcast %cst_54 : f32 to vector<8x512xf32>
    %181 = arith.subf %179, %180 : vector<8x512xf32>
    %182 = arith.select %176, %174, %181 : vector<8x512xi1>, vector<8x512xf32>
    %c0_55 = arith.constant 0 : index
    %c0_56 = arith.constant 0 : index
    %183 = vector.load %arg11[%c0_55, %c0_56] : memref<8x512xf32, #tpu.memory_space<vmem>>, vector<8x512xf32>
    tpu.vector_store %arg11[%c0_55, %c0_56], %182 {strides = array<i32>} : memref<8x512xf32, #tpu.memory_space<vmem>>, vector<8x512xf32>,
    return
  }
}

</mosaic_0001>

<llo_original>
// kernel: _endblock_forward.1
$region0: #{_endblock_forward.1}
  #allocation0 [shape = 'u32[]', space=smem, size = 0x4, offset = 0x4, fixed_abs, tag = 'smem constant byte address 0x4 - core index']
  #allocation1 [shape = 'u32[72,128]{1,0:T(1,128)}', space=vmem, size = 0x9000, scoped, tag = 'internal scratch']
  %s0 = inlined_call_operand.vmem [shape: f32[8,512], index: 0, kind: input, shape index: {}]
  %s1 = inlined_call_operand.vmem [shape: f32[8,512], index: 1, kind: input, shape index: {}]
  %s2 = inlined_call_operand.vmem [shape: bf16[8,72], index: 2, kind: input, shape index: {}]
  %s3 = inlined_call_operand.vmem [shape: f32[8,1], index: 3, kind: input, shape index: {}]
  %s4 = inlined_call_operand.vmem [shape: f32[8,1], index: 4, kind: input, shape index: {}]
  %s5 = inlined_call_operand.vmem [shape: bf16[8,72], index: 5, kind: input, shape index: {}]
  %s6 = inlined_call_operand.vmem [shape: f32[8,1], index: 6, kind: input, shape index: {}]
  %s7 = inlined_call_operand.vmem [shape: f32[8,1], index: 7, kind: input, shape index: {}]
  %s8 = inlined_call_operand.vmem [shape: bf16[8,48], index: 8, kind: input, shape index: {}]
  %s9 = inlined_call_operand.vmem [shape: f32[8,1], index: 9, kind: input, shape index: {}]
  %s10 = inlined_call_operand.vmem [shape: f32[8,512], index: 10, kind: input, shape index: {}]
  %s11 = inlined_call_operand.vmem [shape: f32[8,512], index: 11, kind: output, shape index: {}]
  %s12 = sld [smem:[#allocation0]]
  $region54: #{_endblock_forward.1} parent=0
    _
  %s14 = ssub.s32 1, %s12
  %s15 = scalar_select 0, %s14, %s12
  // Predicated region
  $region2: #{_endblock_forward.1} parent=0 // pred_check
    _
  $region3: #{_endblock_forward.1} parent=0 // pred_check_branch
    %17 = sbr.rel (0) target = $region5
  $region4: #{_endblock_forward.1} parent=0 // pred_region
    _
  $region5: #{_endblock_forward.1} parent=0 // pred_fallthru
    _
  // Predicated region
  $region6: #{_endblock_forward.1} parent=0 // pred_check
    _
  $region7: #{_endblock_forward.1} parent=0 // pred_check_branch
    %19 = sbr.rel (0) target = $region9
  $region8: #{_endblock_forward.1} parent=0 // pred_region
    _
  $region9: #{_endblock_forward.1} parent=0 // pred_fallthru
    _
  // Predicated region
  $region10: #{_endblock_forward.1} parent=0 // pred_check
    _
  $region11: #{_endblock_forward.1} parent=0 // pred_check_branch
    %21 = sbr.rel (0) target = $region13
  $region12: #{_endblock_forward.1} parent=0 // pred_region
    _
  $region13: #{_endblock_forward.1} parent=0 // pred_fallthru
    _
  // Predicated region
  $region14: #{_endblock_forward.1} parent=0 // pred_check
    _
  $region15: #{_endblock_forward.1} parent=0 // pred_check_branch
    %23 = sbr.rel (0) target = $region17
  $region16: #{_endblock_forward.1} parent=0 // pred_region
    _
  $region17: #{_endblock_forward.1} parent=0 // pred_fallthru
    _
  // Predicated region
  $region18: #{_endblock_forward.1} parent=0 // pred_check
    _
  $region19: #{_endblock_forward.1} parent=0 // pred_check_branch
    %25 = sbr.rel (0) target = $region21
  $region20: #{_endblock_forward.1} parent=0 // pred_region
    _
  $region21: #{_endblock_forward.1} parent=0 // pred_fallthru
    _
  // Predicated region
  $region22: #{_endblock_forward.1} parent=0 // pred_check
    _
  $region23: #{_endblock_forward.1} parent=0 // pred_check_branch
    %27 = sbr.rel (0) target = $region25
  $region24: #{_endblock_forward.1} parent=0 // pred_region
    _
  $region25: #{_endblock_forward.1} parent=0 // pred_fallthru
    _
  // Predicated region
  $region26: #{_endblock_forward.1} parent=0 // pred_check
    _
  $region27: #{_endblock_forward.1} parent=0 // pred_check_branch
    %29 = sbr.rel (0) target = $region29
  $region28: #{_endblock_forward.1} parent=0 // pred_region
    _
  $region29: #{_endblock_forward.1} parent=0 // pred_fallthru
    _
  // Predicated region
  $region30: #{_endblock_forward.1} parent=0 // pred_check
    _
  $region31: #{_endblock_forward.1} parent=0 // pred_check_branch
    %31 = sbr.rel (0) target = $region33
  $region32: #{_endblock_forward.1} parent=0 // pred_region
    _
  $region33: #{_endblock_forward.1} parent=0 // pred_fallthru
    _
  // Predicated region
  $region34: #{_endblock_forward.1} parent=0 // pred_check
    _
  $region35: #{_endblock_forward.1} parent=0 // pred_check_branch
    %33 = sbr.rel (0) target = $region37
  $region36: #{_endblock_forward.1} parent=0 // pred_region
    _
  $region37: #{_endblock_forward.1} parent=0 // pred_fallthru
    _
  // Predicated region
  $region38: #{_endblock_forward.1} parent=0 // pred_check
    _
  $region39: #{_endblock_forward.1} parent=0 // pred_check_branch
    %35 = sbr.rel (0) target = $region41
  $region40: #{_endblock_forward.1} parent=0 // pred_region
    _
  $region41: #{_endblock_forward.1} parent=0 // pred_fallthru
    _
  // Predicated region
  $region42: #{_endblock_forward.1} parent=0 // pred_check
    _
  $region43: #{_endblock_forward.1} parent=0 // pred_check_branch
    %37 = sbr.rel (0) target = $region45
  $region44: #{_endblock_forward.1} parent=0 // pred_region
    _
  $region45: #{_endblock_forward.1} parent=0 // pred_fallthru
    _
  %v39 = vld [vmem:[%s1] sm:$0xff]
  %v40 = vld [vmem:[%s1 + $0x8] sm:$0xff]
  %v41 = vld [vmem:[%s1 + $0x10] sm:$0xff]
  %v42 = vld [vmem:[%s1 + $0x18] sm:$0xff]
  %v43 = vld [vmem:[%s2] sm:$0xf]
  %v44 = vld [vmem:[%s0] sm:$0xff]
  %v45 = vld [vmem:[%s0 + $0x8] sm:$0xff]
  %v46 = vld [vmem:[%s0 + $0x10] sm:$0xff]
  %v47 = vld [vmem:[%s0 + $0x18] sm:$0xff]
  %48 = vrot.lane.b32.xlu0 %v44, 17
  %v49 = vpop.permute.xlu0 %48
  %50 = vrot.lane.b32.xlu0 %v45, 17
  %v51 = vpop.permute.xlu0 %50
  %52 = vrot.lane.b32.xlu0 %v46, 17
  %v53 = vpop.permute.xlu0 %52
  %54 = vrot.lane.b32.xlu0 %v47, 17
  %v55 = vpop.permute.xlu0 %54
  %v56 = vlaneseq
  %v57 = vand.u32 %v56, 127
  %vm58 = vcmp.lt.s32.totalorder %v57, 17
  %v59 = vsel %vm58, %v53, %v55
  %v60 = vsel %vm58, %v51, %v53
  %v61 = vsel %vm58, %v49, %v51
  %v62 = vsel %vm58, %v55, %v49
  %v63 = vperm.slane %v39, 0
  %v64 = vperm.slane %v40, 0
  %v65 = vperm.slane %v41, 0
  %v66 = vperm.slane %v42, 0
  %v67 = vmul.f32 %v62, %v63
  %v68 = vmul.f32 %v61, %v64
  %v69 = vmul.f32 %v60, %v65
  %v70 = vmul.f32 %v59, %v66
  %v71 = vpack.c.bf16 %v68, %v67
  %v72 = vpack.c.bf16 %v70, %v69
  %73 = vrot.lane.b32.xlu0 %v44, 16
  %v74 = vpop.permute.xlu0 %73
  %75 = vrot.lane.b32.xlu0 %v45, 16
  %v76 = vpop.permute.xlu0 %75
  %77 = vrot.lane.b32.xlu0 %v46, 16
  %v78 = vpop.permute.xlu0 %77
  %79 = vrot.lane.b32.xlu0 %v47, 16
  %v80 = vpop.permute.xlu0 %79
  %vm81 = vcmp.lt.s32.totalorder %v57, 16
  %v82 = vsel %vm81, %v78, %v80
  %v83 = vsel %vm81, %v76, %v78
  %v84 = vsel %vm81, %v74, %v76
  %v85 = vsel %vm81, %v80, %v74
  %v86 = vperm.slane %v39, 1
  %v87 = vperm.slane %v40, 1
  %v88 = vperm.slane %v41, 1
  %v89 = vperm.slane %v42, 1
  %v90 = vmul.f32 %v85, %v86
  %v91 = vmul.f32 %v84, %v87
  %v92 = vmul.f32 %v83, %v88
  %v93 = vmul.f32 %v82, %v89
  %v94 = vpack.c.bf16 %v91, %v90
  %v95 = vpack.c.bf16 %v93, %v92
  %96 = vrot.lane.b32.xlu0 %v44, 15
  %v97 = vpop.permute.xlu0 %96
  %98 = vrot.lane.b32.xlu0 %v45, 15
  %v99 = vpop.permute.xlu0 %98
  %100 = vrot.lane.b32.xlu0 %v46, 15
  %v101 = vpop.permute.xlu0 %100
  %102 = vrot.lane.b32.xlu0 %v47, 15
  %v103 = vpop.permute.xlu0 %102
  %vm104 = vcmp.lt.s32.totalorder %v57, 15
  %v105 = vsel %vm104, %v101, %v103
  %v106 = vsel %vm104, %v99, %v101
  %v107 = vsel %vm104, %v97, %v99
  %v108 = vsel %vm104, %v103, %v97
  %v109 = vperm.slane %v39, 2
  %v110 = vperm.slane %v40, 2
  %v111 = vperm.slane %v41, 2
  %v112 = vperm.slane %v42, 2
  %v113 = vmul.f32 %v108, %v109
  %v114 = vmul.f32 %v107, %v110
  %v115 = vmul.f32 %v106, %v111
  %v116 = vmul.f32 %v105, %v112
  %v117 = vpack.c.bf16 %v114, %v113
  %v118 = vpack.c.bf16 %v116, %v115
  %119 = vrot.lane.b32.xlu0 %v44, 1
  %v120 = vpop.permute.xlu0 %119
  %121 = vrot.lane.b32.xlu0 %v45, 1
  %v122 = vpop.permute.xlu0 %121
  %123 = vrot.lane.b32.xlu0 %v46, 1
  %v124 = vpop.permute.xlu0 %123
  %125 = vrot.lane.b32.xlu0 %v47, 1
  %v126 = vpop.permute.xlu0 %125
  %vm127 = vcmp.lt.s32.totalorder %v57, 1
  %v128 = vsel %vm127, %v124, %v126
  %v129 = vsel %vm127, %v122, %v124
  %v130 = vsel %vm127, %v120, %v122
  %v131 = vsel %vm127, %v126, %v120
  %v132 = vperm.slane %v39, 3
  %v133 = vperm.slane %v40, 3
  %v134 = vperm.slane %v41, 3
  %v135 = vperm.slane %v42, 3
  %v136 = vmul.f32 %v131, %v132
  %v137 = vmul.f32 %v130, %v133
  %v138 = vmul.f32 %v129, %v134
  %v139 = vmul.f32 %v128, %v135
  %v140 = vpack.c.bf16 %v137, %v136
  %v141 = vpack.c.bf16 %v139, %v138
  %v142 = vpack.c.bf16 %v45, %v44
  %v143 = vpack.c.bf16 %v47, %v46
  %144 = vrot.lane.b32.xlu0 %v44, 127
  %v145 = vpop.permute.xlu0 %144
  %146 = vrot.lane.b32.xlu0 %v45, 127
  %v147 = vpop.permute.xlu0 %146
  %148 = vrot.lane.b32.xlu0 %v46, 127
  %v149 = vpop.permute.xlu0 %148
  %150 = vrot.lane.b32.xlu0 %v47, 127
  %v151 = vpop.permute.xlu0 %150
  %vm152 = vcmp.lt.s32.totalorder %v57, 127
  %v153 = vsel %vm152, %v149, %v151
  %v154 = vsel %vm152, %v147, %v149
  %v155 = vsel %vm152, %v145, %v147
  %v156 = vsel %vm152, %v151, %v145
  %v157 = vperm.slane %v39, 4
  %v158 = vperm.slane %v40, 4
  %v159 = vperm.slane %v41, 4
  %v160 = vperm.slane %v42, 4
  %v161 = vmul.f32 %v155, %v157
  %v162 = vmul.f32 %v154, %v158
  %v163 = vmul.f32 %v153, %v159
  %v164 = vmul.f32 %v156, %v160
  %v165 = vpack.c.bf16 %v162, %v161
  %v166 = vpack.c.bf16 %v164, %v163
  %167 = vrot.lane.b32.xlu0 %v44, 113
  %v168 = vpop.permute.xlu0 %167
  %169 = vrot.lane.b32.xlu0 %v45, 113
  %v170 = vpop.permute.xlu0 %169
  %171 = vrot.lane.b32.xlu0 %v46, 113
  %v172 = vpop.permute.xlu0 %171
  %173 = vrot.lane.b32.xlu0 %v47, 113
  %v174 = vpop.permute.xlu0 %173
  %vm175 = vcmp.lt.s32.totalorder %v57, 113
  %v176 = vsel %vm175, %v172, %v174
  %v177 = vsel %vm175, %v170, %v172
  %v178 = vsel %vm175, %v168, %v170
  %v179 = vsel %vm175, %v174, %v168
  %v180 = vperm.slane %v39, 5
  %v181 = vperm.slane %v40, 5
  %v182 = vperm.slane %v41, 5
  %v183 = vperm.slane %v42, 5
  %v184 = vmul.f32 %v178, %v180
  %v185 = vmul.f32 %v177, %v181
  %v186 = vmul.f32 %v176, %v182
  %v187 = vmul.f32 %v179, %v183
  %v188 = vpack.c.bf16 %v185, %v184
  %v189 = vpack.c.bf16 %v187, %v186
  %190 = vrot.lane.b32.xlu0 %v44, 112
  %v191 = vpop.permute.xlu0 %190
  %192 = vrot.lane.b32.xlu0 %v45, 112
  %v193 = vpop.permute.xlu0 %192
  %194 = vrot.lane.b32.xlu0 %v46, 112
  %v195 = vpop.permute.xlu0 %194
  %196 = vrot.lane.b32.xlu0 %v47, 112
  %v197 = vpop.permute.xlu0 %196
  %vm198 = vcmp.lt.s32.totalorder %v57, 112
  %v199 = vsel %vm198, %v195, %v197
  %v200 = vsel %vm198, %v193, %v195
  %v201 = vsel %vm198, %v191, %v193
  %v202 = vsel %vm198, %v197, %v191
  %v203 = vperm.slane %v39, 6
  %v204 = vperm.slane %v40, 6
  %v205 = vperm.slane %v41, 6
  %v206 = vperm.slane %v42, 6
  %v207 = vmul.f32 %v201, %v203
  %v208 = vmul.f32 %v200, %v204
  %v209 = vmul.f32 %v199, %v205
  %v210 = vmul.f32 %v202, %v206
  %v211 = vpack.c.bf16 %v208, %v207
  %v212 = vpack.c.bf16 %v210, %v209
  %213 = vrot.lane.b32.xlu0 %v44, 111
  %v214 = vpop.permute.xlu0 %213
  %215 = vrot.lane.b32.xlu0 %v45, 111
  %v216 = vpop.permute.xlu0 %215
  %217 = vrot.lane.b32.xlu0 %v46, 111
  %v218 = vpop.permute.xlu0 %217
  %219 = vrot.lane.b32.xlu0 %v47, 111
  %v220 = vpop.permute.xlu0 %219
  %vm221 = vcmp.lt.s32.totalorder %v57, 111
  %v222 = vsel %vm221, %v218, %v220
  %v223 = vsel %vm221, %v216, %v218
  %v224 = vsel %vm221, %v214, %v216
  %v225 = vsel %vm221, %v220, %v214
  %v226 = vperm.slane %v39, 7
  %v227 = vperm.slane %v40, 7
  %v228 = vperm.slane %v41, 7
  %v229 = vperm.slane %v42, 7
  %v230 = vmul.f32 %v224, %v226
  %v231 = vmul.f32 %v223, %v227
  %v232 = vmul.f32 %v222, %v228
  %v233 = vmul.f32 %v225, %v229
  %v234 = vpack.c.bf16 %v231, %v230
  %v235 = vpack.c.bf16 %v233, %v232
  %v238 = vunpack.c.l.b16 %v71
  %v239 = vunpack.c.h.b16 %v71
  %v240 = vunpack.c.l.b16 %v72
  %v241 = vunpack.c.h.b16 %v72
  %v242 = vpack.c.b16 %v238, %v238
  %v243 = vpack.c.b16 %v239, %v239
  %v244 = vpack.c.b16 %v240, %v240
  %v245 = vpack.c.b16 %v241, %v241
  %v248 = vunpack.c.l.b16 %v94
  %v249 = vunpack.c.h.b16 %v94
  %v250 = vunpack.c.l.b16 %v95
  %v251 = vunpack.c.h.b16 %v95
  %v252 = vpack.c.b16 %v248, %v248
  %v253 = vpack.c.b16 %v249, %v249
  %v254 = vpack.c.b16 %v250, %v250
  %v255 = vpack.c.b16 %v251, %v251
  %v258 = vunpack.c.l.b16 %v117
  %v259 = vunpack.c.h.b16 %v117
  %v260 = vunpack.c.l.b16 %v118
  %v261 = vunpack.c.h.b16 %v118
  %v262 = vpack.c.b16 %v258, %v258
  %v263 = vpack.c.b16 %v259, %v259
  %v264 = vpack.c.b16 %v260, %v260
  %v265 = vpack.c.b16 %v261, %v261
  %v268 = vunpack.c.l.b16 %v140
  %v269 = vunpack.c.h.b16 %v140
  %v270 = vunpack.c.l.b16 %v141
  %v271 = vunpack.c.h.b16 %v141
  %v272 = vpack.c.b16 %v268, %v268
  %v273 = vpack.c.b16 %v269, %v269
  %v274 = vpack.c.b16 %v270, %v270
  %v275 = vpack.c.b16 %v271, %v271
  %v278 = vunpack.c.l.b16 %v142
  %v279 = vunpack.c.h.b16 %v142
  %v280 = vunpack.c.l.b16 %v143
  %v281 = vunpack.c.h.b16 %v143
  %v282 = vpack.c.b16 %v278, %v278
  %v283 = vpack.c.b16 %v279, %v279
  %v284 = vpack.c.b16 %v280, %v280
  %v285 = vpack.c.b16 %v281, %v281
  %v288 = vunpack.c.l.b16 %v165
  %v289 = vunpack.c.h.b16 %v165
  %v290 = vunpack.c.l.b16 %v166
  %v291 = vunpack.c.h.b16 %v166
  %v292 = vpack.c.b16 %v288, %v288
  %v293 = vpack.c.b16 %v289, %v289
  %v294 = vpack.c.b16 %v290, %v290
  %v295 = vpack.c.b16 %v291, %v291
  %v298 = vunpack.c.l.b16 %v188
  %v299 = vunpack.c.h.b16 %v188
  %v300 = vunpack.c.l.b16 %v189
  %v301 = vunpack.c.h.b16 %v189
  %v302 = vpack.c.b16 %v298, %v298
  %v303 = vpack.c.b16 %v299, %v299
  %v304 = vpack.c.b16 %v300, %v300
  %v305 = vpack.c.b16 %v301, %v301
  %v308 = vunpack.c.l.b16 %v211
  %v309 = vunpack.c.h.b16 %v211
  %v310 = vunpack.c.l.b16 %v212
  %v311 = vunpack.c.h.b16 %v212
  %v312 = vpack.c.b16 %v308, %v308
  %v313 = vpack.c.b16 %v309, %v309
  %v314 = vpack.c.b16 %v310, %v310
  %v315 = vpack.c.b16 %v311, %v311
  %v318 = vunpack.c.l.b16 %v234
  %v319 = vunpack.c.h.b16 %v234
  %v320 = vunpack.c.l.b16 %v235
  %v321 = vunpack.c.h.b16 %v235
  %v322 = vpack.c.b16 %v318, %v318
  %v323 = vpack.c.b16 %v319, %v319
  %v324 = vpack.c.b16 %v320, %v320
  %v325 = vpack.c.b16 %v321, %v321
  %vm326 = vcmask 1043456
  %v329 = vsel %vm326, %v242, %v252
  %v333 = vsel %vm326, %v243, %v253
  %v337 = vsel %vm326, %v244, %v254
  %v341 = vsel %vm326, %v245, %v255
  %v345 = vsel %vm326, %v262, %v272
  %v349 = vsel %vm326, %v263, %v273
  %v353 = vsel %vm326, %v264, %v274
  %v357 = vsel %vm326, %v265, %v275
  %v361 = vsel %vm326, %v282, %v292
  %v365 = vsel %vm326, %v283, %v293
  %v369 = vsel %vm326, %v284, %v294
  %v373 = vsel %vm326, %v285, %v295
  %v377 = vsel %vm326, %v302, %v312
  %v381 = vsel %vm326, %v303, %v313
  %v385 = vsel %vm326, %v304, %v314
  %v389 = vsel %vm326, %v305, %v315
  %vm391 = vcmask 588800
  %v393 = vsel %vm391, %v43, 0
  %v396 = vsel %vm326, %v322, 0
  %v399 = vsel %vm326, %v323, 0
  %v402 = vsel %vm326, %v324, 0
  %v405 = vsel %vm326, %v325, 0
  %407 = vmatpush.bf16.msra.mxu0 0
  %408 = vmatpush.bf16.msra.mxu0 0
  %409 = vmatpush.bf16.msra.mxu0 0
  %410 = vmatpush.bf16.msra.mxu0 %v396
  %411 = vmatpush.bf16.msra.mxu0 %v377
  %412 = vmatpush.bf16.msra.mxu0 %v361
  %413 = vmatpush.bf16.msra.mxu0 %v345
  %414 = vmatpush.bf16.msra.mxu0 %v329
  %415 = vmatmul.bf16.gmra.mxu0 %v393
  %v416 = vpop.f32.mrf.mxu0
  %v417 = vadd.f32 0.0, %v416
  %v418 = vpop.f32.mrf.mxu0
  %419 = vdwg.mxu0
  %420 = vmatpush.bf16.msra.mxu0 0
  %421 = vmatpush.bf16.msra.mxu0 0
  %422 = vmatpush.bf16.msra.mxu0 0
  %423 = vmatpush.bf16.msra.mxu0 %v399
  %424 = vmatpush.bf16.msra.mxu0 %v381
  %425 = vmatpush.bf16.msra.mxu0 %v365
  %426 = vmatpush.bf16.msra.mxu0 %v349
  %427 = vmatpush.bf16.msra.mxu0 %v333
  %428 = vmatmul.bf16.gmra.mxu0 %v393
  %v429 = vpop.f32.mrf.mxu0
  %v430 = vadd.f32 0.0, %v429
  %v431 = vpop.f32.mrf.mxu0
  %432 = vdwg.mxu0
  %433 = vmatpush.bf16.msra.mxu0 0
  %434 = vmatpush.bf16.msra.mxu0 0
  %435 = vmatpush.bf16.msra.mxu0 0
  %436 = vmatpush.bf16.msra.mxu0 %v402
  %437 = vmatpush.bf16.msra.mxu0 %v385
  %438 = vmatpush.bf16.msra.mxu0 %v369
  %439 = vmatpush.bf16.msra.mxu0 %v353
  %440 = vmatpush.bf16.msra.mxu0 %v337
  %441 = vmatmul.bf16.gmra.mxu0 %v393
  %v442 = vpop.f32.mrf.mxu0
  %v443 = vadd.f32 0.0, %v442
  %v444 = vpop.f32.mrf.mxu0
  %445 = vdwg.mxu0
  %446 = vmatpush.bf16.msra.mxu0 0
  %447 = vmatpush.bf16.msra.mxu0 0
  %448 = vmatpush.bf16.msra.mxu0 0
  %449 = vmatpush.bf16.msra.mxu0 %v405
  %450 = vmatpush.bf16.msra.mxu0 %v389
  %451 = vmatpush.bf16.msra.mxu0 %v373
  %452 = vmatpush.bf16.msra.mxu0 %v357
  %453 = vmatpush.bf16.msra.mxu0 %v341
  %454 = vmatmul.bf16.gmra.mxu0 %v393
  %v455 = vpop.f32.mrf.mxu0
  %v456 = vadd.f32 0.0, %v455
  %v457 = vpop.f32.mrf.mxu0
  %458 = vdwg.mxu0
  %v459 = vld [vmem:[%s3] sm:$0xff]
  %v460 = vld [vmem:[%s4] sm:$0xff]
  %v461 = vadd.f32 %v417, %v430
  %v462 = vadd.f32 %v461, %v443
  %v463 = vadd.f32 %v462, %v456
  %464 = vadd.xlane.f32.xlu0 %v463
  %v465 = vpop.xlane.xlu0 %464
  %v466 = vmul.f32 %v465, 0.001953125
  %v467 = vmul.f32 %v417, %v417
  %v468 = vmul.f32 %v430, %v430
  %v469 = vmul.f32 %v443, %v443
  %v470 = vmul.f32 %v456, %v456
  %v471 = vadd.f32 %v467, %v468
  %v472 = vadd.f32 %v471, %v469
  %v473 = vadd.f32 %v472, %v470
  %474 = vadd.xlane.f32.xlu0 %v473
  %v475 = vpop.xlane.xlu0 %474
  %v476 = vmul.f32 %v475, 0.001953125
  %v477 = vmul.f32 %v466, %v466
  %v478 = vsub.f32 %v476, %v477
  %v479 = vmax.f32 %v478, 0.0
  %v480 = vadd.f32 %v479, 1e-05
  %v481 = vrsqrt.pop %v480
  %v482 = vmul.f32 %v481, %v480
  %v483 = vmul.f32 %v482, %v481
  %v484 = vmul.f32 0.5, %v483
  %v485 = vsub.f32 1.5, %v484
  %v486 = vmul.f32 %v481, %v485
  %vm487 = vweird.f32 %v480
  %vm488 = vweird.f32 %v481
  %vm489 = vmor %vm487, %vm488
  %v490 = vsel %vm489, %v481, %v486
  %v491 = vmul.f32 %v459, %v490
  %v492 = vmul.f32 %v491, %v466
  %v493 = vsub.f32 %v460, %v492
  %495 = vset.pattern.permute.xlu0 0
  %496 = vperm.xlu0 %495, %v491
  %v497 = vpop.permute.xlu0 %496
  %v499 = vmul.f32 %v417, %v497
  %v500 = vmul.f32 %v430, %v497
  %v501 = vmul.f32 %v443, %v497
  %v502 = vmul.f32 %v456, %v497
  %504 = vset.pattern.permute.xlu0 0
  %505 = vperm.xlu0 %504, %v493
  %v506 = vpop.permute.xlu0 %505
  %v508 = vadd.f32 %v499, %v506
  %v509 = vadd.f32 %v500, %v506
  %v510 = vadd.f32 %v501, %v506
  %v511 = vadd.f32 %v502, %v506
  %vm512 = vcmp.gt.f32.partialorder %v508, 0.0
  %vm513 = vcmp.gt.f32.partialorder %v509, 0.0
  %vm514 = vcmp.gt.f32.partialorder %v510, 0.0
  %vm515 = vcmp.gt.f32.partialorder %v511, 0.0
  %v516 = vmin.f32 %v508, 0.0
  %v517 = vmin.f32 %v509, 0.0
  %v518 = vmin.f32 %v510, 0.0
  %v519 = vmin.f32 %v511, 0.0
  %v520 = vmul.f32 %v516, 1.442695
  %v521 = vpow.pop %v520
  %v522 = vmul.f32 %v517, 1.442695
  %v523 = vpow.pop %v522
  %v524 = vmul.f32 %v518, 1.442695
  %v525 = vpow.pop %v524
  %v526 = vmul.f32 %v519, 1.442695
  %v527 = vpow.pop %v526
  %v528 = vsub.f32 %v521, 1.0
  %v529 = vsub.f32 %v523, 1.0
  %v530 = vsub.f32 %v525, 1.0
  %v531 = vsub.f32 %v527, 1.0
  %v532 = vsel %vm512, %v508, %v528
  %v533 = vsel %vm513, %v509, %v529
  %v534 = vsel %vm514, %v510, %v530
  %v535 = vsel %vm515, %v511, %v531
  %v536 = vld [vmem:[%s5] sm:$0xf]
  %537 = vrot.lane.b32.xlu0 %v532, 17
  %v538 = vpop.permute.xlu0 %537
  %539 = vrot.lane.b32.xlu0 %v533, 17
  %v540 = vpop.permute.xlu0 %539
  %541 = vrot.lane.b32.xlu0 %v534, 17
  %v542 = vpop.permute.xlu0 %541
  %543 = vrot.lane.b32.xlu0 %v535, 17
  %v544 = vpop.permute.xlu0 %543
  %v545 = vsel %vm58, %v542, %v544
  %v546 = vsel %vm58, %v540, %v542
  %v547 = vsel %vm58, %v538, %v540
  %v548 = vsel %vm58, %v544, %v538
  %v549 = vmul.f32 %v548, %v63
  %v550 = vmul.f32 %v547, %v64
  %v551 = vmul.f32 %v546, %v65
  %v552 = vmul.f32 %v545, %v66
  %v553 = vpack.c.bf16 %v550, %v549
  %v554 = vpack.c.bf16 %v552, %v551
  %555 = vrot.lane.b32.xlu0 %v532, 16
  %v556 = vpop.permute.xlu0 %555
  %557 = vrot.lane.b32.xlu0 %v533, 16
  %v558 = vpop.permute.xlu0 %557
  %559 = vrot.lane.b32.xlu0 %v534, 16
  %v560 = vpop.permute.xlu0 %559
  %561 = vrot.lane.b32.xlu0 %v535, 16
  %v562 = vpop.permute.xlu0 %561
  %v563 = vsel %vm81, %v560, %v562
  %v564 = vsel %vm81, %v558, %v560
  %v565 = vsel %vm81, %v556, %v558
  %v566 = vsel %vm81, %v562, %v556
  %v567 = vmul.f32 %v566, %v86
  %v568 = vmul.f32 %v565, %v87
  %v569 = vmul.f32 %v564, %v88
  %v570 = vmul.f32 %v563, %v89
  %v571 = vpack.c.bf16 %v568, %v567
  %v572 = vpack.c.bf16 %v570, %v569
  %573 = vrot.lane.b32.xlu0 %v532, 15
  %v574 = vpop.permute.xlu0 %573
  %575 = vrot.lane.b32.xlu0 %v533, 15
  %v576 = vpop.permute.xlu0 %575
  %577 = vrot.lane.b32.xlu0 %v534, 15
  %v578 = vpop.permute.xlu0 %577
  %579 = vrot.lane.b32.xlu0 %v535, 15
  %v580 = vpop.permute.xlu0 %579
  %v581 = vsel %vm104, %v578, %v580
  %v582 = vsel %vm104, %v576, %v578
  %v583 = vsel %vm104, %v574, %v576
  %v584 = vsel %vm104, %v580, %v574
  %v585 = vmul.f32 %v584, %v109
  %v586 = vmul.f32 %v583, %v110
  %v587 = vmul.f32 %v582, %v111
  %v588 = vmul.f32 %v581, %v112
  %v589 = vpack.c.bf16 %v586, %v585
  %v590 = vpack.c.bf16 %v588, %v587
  %591 = vrot.lane.b32.xlu0 %v532, 1
  %v592 = vpop.permute.xlu0 %591
  %593 = vrot.lane.b32.xlu0 %v533, 1
  %v594 = vpop.permute.xlu0 %593
  %595 = vrot.lane.b32.xlu0 %v534, 1
  %v596 = vpop.permute.xlu0 %595
  %597 = vrot.lane.b32.xlu0 %v535, 1
  %v598 = vpop.permute.xlu0 %597
  %v599 = vsel %vm127, %v596, %v598
  %v600 = vsel %vm127, %v594, %v596
  %v601 = vsel %vm127, %v592, %v594
  %v602 = vsel %vm127, %v598, %v592
  %v603 = vmul.f32 %v602, %v132
  %v604 = vmul.f32 %v601, %v133
  %v605 = vmul.f32 %v600, %v134
  %v606 = vmul.f32 %v599, %v135
  %v607 = vpack.c.bf16 %v604, %v603
  %v608 = vpack.c.bf16 %v606, %v605
  %v609 = vpack.c.bf16 %v533, %v532
  %v610 = vpack.c.bf16 %v535, %v534
  %611 = vrot.lane.b32.xlu0 %v532, 127
  %v612 = vpop.permute.xlu0 %611
  %613 = vrot.lane.b32.xlu0 %v533, 127
  %v614 = vpop.permute.xlu0 %613
  %615 = vrot.lane.b32.xlu0 %v534, 127
  %v616 = vpop.permute.xlu0 %615
  %617 = vrot.lane.b32.xlu0 %v535, 127
  %v618 = vpop.permute.xlu0 %617
  %v619 = vsel %vm152, %v616, %v618
  %v620 = vsel %vm152, %v614, %v616
  %v621 = vsel %vm152, %v612, %v614
  %v622 = vsel %vm152, %v618, %v612
  %v623 = vmul.f32 %v621, %v157
  %v624 = vmul.f32 %v620, %v158
  %v625 = vmul.f32 %v619, %v159
  %v626 = vmul.f32 %v622, %v160
  %v627 = vpack.c.bf16 %v624, %v623
  %v628 = vpack.c.bf16 %v626, %v625
  %629 = vrot.lane.b32.xlu0 %v532, 113
  %v630 = vpop.permute.xlu0 %629
  %631 = vrot.lane.b32.xlu0 %v533, 113
  %v632 = vpop.permute.xlu0 %631
  %633 = vrot.lane.b32.xlu0 %v534, 113
  %v634 = vpop.permute.xlu0 %633
  %635 = vrot.lane.b32.xlu0 %v535, 113
  %v636 = vpop.permute.xlu0 %635
  %v637 = vsel %vm175, %v634, %v636
  %v638 = vsel %vm175, %v632, %v634
  %v639 = vsel %vm175, %v630, %v632
  %v640 = vsel %vm175, %v636, %v630
  %v641 = vmul.f32 %v639, %v180
  %v642 = vmul.f32 %v638, %v181
  %v643 = vmul.f32 %v637, %v182
  %v644 = vmul.f32 %v640, %v183
  %v645 = vpack.c.bf16 %v642, %v641
  %v646 = vpack.c.bf16 %v644, %v643
  %647 = vrot.lane.b32.xlu0 %v532, 112
  %v648 = vpop.permute.xlu0 %647
  %649 = vrot.lane.b32.xlu0 %v533, 112
  %v650 = vpop.permute.xlu0 %649
  %651 = vrot.lane.b32.xlu0 %v534, 112
  %v652 = vpop.permute.xlu0 %651
  %653 = vrot.lane.b32.xlu0 %v535, 112
  %v654 = vpop.permute.xlu0 %653
  %v655 = vsel %vm198, %v652, %v654
  %v656 = vsel %vm198, %v650, %v652
  %v657 = vsel %vm198, %v648, %v650
  %v658 = vsel %vm198, %v654, %v648
  %v659 = vmul.f32 %v657, %v203
  %v660 = vmul.f32 %v656, %v204
  %v661 = vmul.f32 %v655, %v205
  %v662 = vmul.f32 %v658, %v206
  %v663 = vpack.c.bf16 %v660, %v659
  %v664 = vpack.c.bf16 %v662, %v661
  %665 = vrot.lane.b32.xlu0 %v532, 111
  %v666 = vpop.permute.xlu0 %665
  %667 = vrot.lane.b32.xlu0 %v533, 111
  %v668 = vpop.permute.xlu0 %667
  %669 = vrot.lane.b32.xlu0 %v534, 111
  %v670 = vpop.permute.xlu0 %669
  %671 = vrot.lane.b32.xlu0 %v535, 111
  %v672 = vpop.permute.xlu0 %671
  %v673 = vsel %vm221, %v670, %v672
  %v674 = vsel %vm221, %v668, %v670
  %v675 = vsel %vm221, %v666, %v668
  %v676 = vsel %vm221, %v672, %v666
  %v677 = vmul.f32 %v675, %v226
  %v678 = vmul.f32 %v674, %v227
  %v679 = vmul.f32 %v673, %v228
  %v680 = vmul.f32 %v676, %v229
  %v681 = vpack.c.bf16 %v678, %v677
  %v682 = vpack.c.bf16 %v680, %v679
  %v685 = vunpack.c.l.b16 %v553
  %v686 = vunpack.c.h.b16 %v553
  %v687 = vunpack.c.l.b16 %v554
  %v688 = vunpack.c.h.b16 %v554
  %v689 = vpack.c.b16 %v685, %v685
  %v690 = vpack.c.b16 %v686, %v686
  %v691 = vpack.c.b16 %v687, %v687
  %v692 = vpack.c.b16 %v688, %v688
  %v695 = vunpack.c.l.b16 %v571
  %v696 = vunpack.c.h.b16 %v571
  %v697 = vunpack.c.l.b16 %v572
  %v698 = vunpack.c.h.b16 %v572
  %v699 = vpack.c.b16 %v695, %v695
  %v700 = vpack.c.b16 %v696, %v696
  %v701 = vpack.c.b16 %v697, %v697
  %v702 = vpack.c.b16 %v698, %v698
  %v705 = vunpack.c.l.b16 %v589
  %v706 = vunpack.c.h.b16 %v589
  %v707 = vunpack.c.l.b16 %v590
  %v708 = vunpack.c.h.b16 %v590
  %v709 = vpack.c.b16 %v705, %v705
  %v710 = vpack.c.b16 %v706, %v706
  %v711 = vpack.c.b16 %v707, %v707
  %v712 = vpack.c.b16 %v708, %v708
  %v715 = vunpack.c.l.b16 %v607
  %v716 = vunpack.c.h.b16 %v607
  %v717 = vunpack.c.l.b16 %v608
  %v718 = vunpack.c.h.b16 %v608
  %v719 = vpack.c.b16 %v715, %v715
  %v720 = vpack.c.b16 %v716, %v716
  %v721 = vpack.c.b16 %v717, %v717
  %v722 = vpack.c.b16 %v718, %v718
  %v725 = vunpack.c.l.b16 %v609
  %v726 = vunpack.c.h.b16 %v609
  %v727 = vunpack.c.l.b16 %v610
  %v728 = vunpack.c.h.b16 %v610
  %v729 = vpack.c.b16 %v725, %v725
  %v730 = vpack.c.b16 %v726, %v726
  %v731 = vpack.c.b16 %v727, %v727
  %v732 = vpack.c.b16 %v728, %v728
  %v735 = vunpack.c.l.b16 %v627
  %v736 = vunpack.c.h.b16 %v627
  %v737 = vunpack.c.l.b16 %v628
  %v738 = vunpack.c.h.b16 %v628
  %v739 = vpack.c.b16 %v735, %v735
  %v740 = vpack.c.b16 %v736, %v736
  %v741 = vpack.c.b16 %v737, %v737
  %v742 = vpack.c.b16 %v738, %v738
  %v745 = vunpack.c.l.b16 %v645
  %v746 = vunpack.c.h.b16 %v645
  %v747 = vunpack.c.l.b16 %v646
  %v748 = vunpack.c.h.b16 %v646
  %v749 = vpack.c.b16 %v745, %v745
  %v750 = vpack.c.b16 %v746, %v746
  %v751 = vpack.c.b16 %v747, %v747
  %v752 = vpack.c.b16 %v748, %v748
  %v755 = vunpack.c.l.b16 %v663
  %v756 = vunpack.c.h.b16 %v663
  %v757 = vunpack.c.l.b16 %v664
  %v758 = vunpack.c.h.b16 %v664
  %v759 = vpack.c.b16 %v755, %v755
  %v760 = vpack.c.b16 %v756, %v756
  %v761 = vpack.c.b16 %v757, %v757
  %v762 = vpack.c.b16 %v758, %v758
  %v765 = vunpack.c.l.b16 %v681
  %v766 = vunpack.c.h.b16 %v681
  %v767 = vunpack.c.l.b16 %v682
  %v768 = vunpack.c.h.b16 %v682
  %v769 = vpack.c.b16 %v765, %v765
  %v770 = vpack.c.b16 %v766, %v766
  %v771 = vpack.c.b16 %v767, %v767
  %v772 = vpack.c.b16 %v768, %v768
  %v775 = vsel %vm326, %v689, %v699
  %v779 = vsel %vm326, %v690, %v700
  %v783 = vsel %vm326, %v691, %v701
  %v787 = vsel %vm326, %v692, %v702
  %v791 = vsel %vm326, %v709, %v719
  %v795 = vsel %vm326, %v710, %v720
  %v799 = vsel %vm326, %v711, %v721
  %v803 = vsel %vm326, %v712, %v722
  %v807 = vsel %vm326, %v729, %v739
  %v811 = vsel %vm326, %v730, %v740
  %v815 = vsel %vm326, %v731, %v741
  %v819 = vsel %vm326, %v732, %v742
  %v823 = vsel %vm326, %v749, %v759
  %v827 = vsel %vm326, %v750, %v760
  %v831 = vsel %vm326, %v751, %v761
  %v835 = vsel %vm326, %v752, %v762
  %v838 = vsel %vm391, %v536, 0
  %v841 = vsel %vm326, %v769, 0
  %v844 = vsel %vm326, %v770, 0
  %v847 = vsel %vm326, %v771, 0
  %v850 = vsel %vm326, %v772, 0
  %852 = vmatpush.bf16.msra.mxu0 0
  %853 = vmatpush.bf16.msra.mxu0 0
  %854 = vmatpush.bf16.msra.mxu0 0
  %855 = vmatpush.bf16.msra.mxu0 %v841
  %856 = vmatpush.bf16.msra.mxu0 %v823
  %857 = vmatpush.bf16.msra.mxu0 %v807
  %858 = vmatpush.bf16.msra.mxu0 %v791
  %859 = vmatpush.bf16.msra.mxu0 %v775
  %860 = vmatmul.bf16.gmra.mxu0 %v838
  %v861 = vpop.f32.mrf.mxu0
  %v862 = vadd.f32 0.0, %v861
  %v863 = vpop.f32.mrf.mxu0
  %864 = vdwg.mxu0
  %865 = vmatpush.bf16.msra.mxu0 0
  %866 = vmatpush.bf16.msra.mxu0 0
  %867 = vmatpush.bf16.msra.mxu0 0
  %868 = vmatpush.bf16.msra.mxu0 %v844
  %869 = vmatpush.bf16.msra.mxu0 %v827
  %870 = vmatpush.bf16.msra.mxu0 %v811
  %871 = vmatpush.bf16.msra.mxu0 %v795
  %872 = vmatpush.bf16.msra.mxu0 %v779
  %873 = vmatmul.bf16.gmra.mxu0 %v838
  %v874 = vpop.f32.mrf.mxu0
  %v875 = vadd.f32 0.0, %v874
  %v876 = vpop.f32.mrf.mxu0
  %877 = vdwg.mxu0
  %878 = vmatpush.bf16.msra.mxu0 0
  %879 = vmatpush.bf16.msra.mxu0 0
  %880 = vmatpush.bf16.msra.mxu0 0
  %881 = vmatpush.bf16.msra.mxu0 %v847
  %882 = vmatpush.bf16.msra.mxu0 %v831
  %883 = vmatpush.bf16.msra.mxu0 %v815
  %884 = vmatpush.bf16.msra.mxu0 %v799
  %885 = vmatpush.bf16.msra.mxu0 %v783
  %886 = vmatmul.bf16.gmra.mxu0 %v838
  %v887 = vpop.f32.mrf.mxu0
  %v888 = vadd.f32 0.0, %v887
  %v889 = vpop.f32.mrf.mxu0
  %890 = vdwg.mxu0
  %891 = vmatpush.bf16.msra.mxu0 0
  %892 = vmatpush.bf16.msra.mxu0 0
  %893 = vmatpush.bf16.msra.mxu0 0
  %894 = vmatpush.bf16.msra.mxu0 %v850
  %895 = vmatpush.bf16.msra.mxu0 %v835
  %896 = vmatpush.bf16.msra.mxu0 %v819
  %897 = vmatpush.bf16.msra.mxu0 %v803
  %898 = vmatpush.bf16.msra.mxu0 %v787
  %899 = vmatmul.bf16.gmra.mxu0 %v838
  %v900 = vpop.f32.mrf.mxu0
  %v901 = vadd.f32 0.0, %v900
  %v902 = vpop.f32.mrf.mxu0
  %903 = vdwg.mxu0
  %v904 = vld [vmem:[%s6] sm:$0xff]
  %v905 = vld [vmem:[%s7] sm:$0xff]
  %v906 = vadd.f32 %v862, %v875
  %v907 = vadd.f32 %v906, %v888
  %v908 = vadd.f32 %v907, %v901
  %909 = vadd.xlane.f32.xlu0 %v908
  %v910 = vpop.xlane.xlu0 %909
  %v911 = vmul.f32 %v910, 0.001953125
  %v912 = vmul.f32 %v862, %v862
  %v913 = vmul.f32 %v875, %v875
  %v914 = vmul.f32 %v888, %v888
  %v915 = vmul.f32 %v901, %v901
  %v916 = vadd.f32 %v912, %v913
  %v917 = vadd.f32 %v916, %v914
  %v918 = vadd.f32 %v917, %v915
  %919 = vadd.xlane.f32.xlu0 %v918
  %v920 = vpop.xlane.xlu0 %919
  %v921 = vmul.f32 %v920, 0.001953125
  %v922 = vmul.f32 %v911, %v911
  %v923 = vsub.f32 %v921, %v922
  %v924 = vmax.f32 %v923, 0.0
  %v925 = vadd.f32 %v924, 1e-05
  %v926 = vrsqrt.pop %v925
  %v927 = vmul.f32 %v926, %v925
  %v928 = vmul.f32 %v927, %v926
  %v929 = vmul.f32 0.5, %v928
  %v930 = vsub.f32 1.5, %v929
  %v931 = vmul.f32 %v926, %v930
  %vm932 = vweird.f32 %v925
  %vm933 = vweird.f32 %v926
  %vm934 = vmor %vm932, %vm933
  %v935 = vsel %vm934, %v926, %v931
  %v936 = vmul.f32 %v904, %v935
  %v937 = vmul.f32 %v936, %v911
  %v938 = vsub.f32 %v905, %v937
  %940 = vset.pattern.permute.xlu0 0
  %941 = vperm.xlu0 %940, %v936
  %v942 = vpop.permute.xlu0 %941
  %v944 = vmul.f32 %v862, %v942
  %v945 = vmul.f32 %v875, %v942
  %v946 = vmul.f32 %v888, %v942
  %v947 = vmul.f32 %v901, %v942
  %949 = vset.pattern.permute.xlu0 0
  %950 = vperm.xlu0 %949, %v938
  %v951 = vpop.permute.xlu0 %950
  %v953 = vadd.f32 %v944, %v951
  %v954 = vadd.f32 %v945, %v951
  %v955 = vadd.f32 %v946, %v951
  %v956 = vadd.f32 %v947, %v951
  %vm957 = vcmp.gt.f32.partialorder %v953, 0.0
  %vm958 = vcmp.gt.f32.partialorder %v954, 0.0
  %vm959 = vcmp.gt.f32.partialorder %v955, 0.0
  %vm960 = vcmp.gt.f32.partialorder %v956, 0.0
  %v961 = vmin.f32 %v953, 0.0
  %v962 = vmin.f32 %v954, 0.0
  %v963 = vmin.f32 %v955, 0.0
  %v964 = vmin.f32 %v956, 0.0
  %v965 = vmul.f32 %v961, 1.442695
  %v966 = vpow.pop %v965
  %v967 = vmul.f32 %v962, 1.442695
  %v968 = vpow.pop %v967
  %v969 = vmul.f32 %v963, 1.442695
  %v970 = vpow.pop %v969
  %v971 = vmul.f32 %v964, 1.442695
  %v972 = vpow.pop %v971
  %v973 = vsub.f32 %v966, 1.0
  %v974 = vsub.f32 %v968, 1.0
  %v975 = vsub.f32 %v970, 1.0
  %v976 = vsub.f32 %v972, 1.0
  %v977 = vsel %vm957, %v953, %v973
  %v978 = vsel %vm958, %v954, %v974
  %v979 = vsel %vm959, %v955, %v975
  %v980 = vsel %vm960, %v956, %v976
  %v981 = vpack.c.bf16 %v978, %v977
  %v982 = vpack.c.bf16 %v980, %v979
  %983 = vrot.lane.b32.xlu0 %v977, 127
  %v984 = vpop.permute.xlu0 %983
  %985 = vrot.lane.b32.xlu0 %v978, 127
  %v986 = vpop.permute.xlu0 %985
  %987 = vrot.lane.b32.xlu0 %v979, 127
  %v988 = vpop.permute.xlu0 %987
  %989 = vrot.lane.b32.xlu0 %v980, 127
  %v990 = vpop.permute.xlu0 %989
  %v991 = vsel %vm152, %v988, %v990
  %v992 = vsel %vm152, %v986, %v988
  %v993 = vsel %vm152, %v984, %v986
  %v994 = vsel %vm152, %v990, %v984
  %v995 = vpack.c.bf16 %v992, %v993
  %v996 = vpack.c.bf16 %v994, %v991
  %997 = vrot.lane.b32.xlu0 %v977, 126
  %v998 = vpop.permute.xlu0 %997
  %999 = vrot.lane.b32.xlu0 %v978, 126
  %v1000 = vpop.permute.xlu0 %999
  %1001 = vrot.lane.b32.xlu0 %v979, 126
  %v1002 = vpop.permute.xlu0 %1001
  %1003 = vrot.lane.b32.xlu0 %v980, 126
  %v1004 = vpop.permute.xlu0 %1003
  %vm1005 = vcmp.lt.s32.totalorder %v57, 126
  %v1006 = vsel %vm1005, %v1002, %v1004
  %v1007 = vsel %vm1005, %v1000, %v1002
  %v1008 = vsel %vm1005, %v998, %v1000
  %v1009 = vsel %vm1005, %v1004, %v998
  %v1010 = vpack.c.bf16 %v1007, %v1008
  %v1011 = vpack.c.bf16 %v1009, %v1006
  %1012 = vrot.lane.b32.xlu0 %v977, 112
  %v1013 = vpop.permute.xlu0 %1012
  %1014 = vrot.lane.b32.xlu0 %v978, 112
  %v1015 = vpop.permute.xlu0 %1014
  %1016 = vrot.lane.b32.xlu0 %v979, 112
  %v1017 = vpop.permute.xlu0 %1016
  %1018 = vrot.lane.b32.xlu0 %v980, 112
  %v1019 = vpop.permute.xlu0 %1018
  %v1020 = vsel %vm198, %v1017, %v1019
  %v1021 = vsel %vm198, %v1015, %v1017
  %v1022 = vsel %vm198, %v1013, %v1015
  %v1023 = vsel %vm198, %v1019, %v1013
  %v1024 = vpack.c.bf16 %v1021, %v1022
  %v1025 = vpack.c.bf16 %v1023, %v1020
  %1026 = vrot.lane.b32.xlu0 %v977, 111
  %v1027 = vpop.permute.xlu0 %1026
  %1028 = vrot.lane.b32.xlu0 %v978, 111
  %v1029 = vpop.permute.xlu0 %1028
  %1030 = vrot.lane.b32.xlu0 %v979, 111
  %v1031 = vpop.permute.xlu0 %1030
  %1032 = vrot.lane.b32.xlu0 %v980, 111
  %v1033 = vpop.permute.xlu0 %1032
  %v1034 = vsel %vm221, %v1031, %v1033
  %v1035 = vsel %vm221, %v1029, %v1031
  %v1036 = vsel %vm221, %v1027, %v1029
  %v1037 = vsel %vm221, %v1033, %v1027
  %v1038 = vpack.c.bf16 %v1035, %v1036
  %v1039 = vpack.c.bf16 %v1037, %v1034
  %1040 = vrot.lane.b32.xlu0 %v977, 110
  %v1041 = vpop.permute.xlu0 %1040
  %1042 = vrot.lane.b32.xlu0 %v978, 110
  %v1043 = vpop.permute.xlu0 %1042
  %1044 = vrot.lane.b32.xlu0 %v979, 110
  %v1045 = vpop.permute.xlu0 %1044
  %1046 = vrot.lane.b32.xlu0 %v980, 110
  %v1047 = vpop.permute.xlu0 %1046
  %vm1048 = vcmp.lt.s32.totalorder %v57, 110
  %v1049 = vsel %vm1048, %v1045, %v1047
  %v1050 = vsel %vm1048, %v1043, %v1045
  %v1051 = vsel %vm1048, %v1041, %v1043
  %v1052 = vsel %vm1048, %v1047, %v1041
  %v1053 = vpack.c.bf16 %v1050, %v1051
  %v1054 = vpack.c.bf16 %v1052, %v1049
  %v1057 = vunpack.c.l.b16 %v981
  %v1058 = vunpack.c.h.b16 %v981
  %v1059 = vunpack.c.l.b16 %v982
  %v1060 = vunpack.c.h.b16 %v982
  %v1061 = vpack.c.b16 %v1057, %v1057
  %v1062 = vpack.c.b16 %v1058, %v1058
  %v1063 = vpack.c.b16 %v1059, %v1059
  %v1064 = vpack.c.b16 %v1060, %v1060
  %v1067 = vunpack.c.l.b16 %v995
  %v1068 = vunpack.c.h.b16 %v995
  %v1069 = vunpack.c.l.b16 %v996
  %v1070 = vunpack.c.h.b16 %v996
  %v1071 = vpack.c.b16 %v1067, %v1067
  %v1072 = vpack.c.b16 %v1068, %v1068
  %v1073 = vpack.c.b16 %v1069, %v1069
  %v1074 = vpack.c.b16 %v1070, %v1070
  %v1077 = vunpack.c.l.b16 %v1010
  %v1078 = vunpack.c.h.b16 %v1010
  %v1079 = vunpack.c.l.b16 %v1011
  %v1080 = vunpack.c.h.b16 %v1011
  %v1081 = vpack.c.b16 %v1077, %v1077
  %v1082 = vpack.c.b16 %v1078, %v1078
  %v1083 = vpack.c.b16 %v1079, %v1079
  %v1084 = vpack.c.b16 %v1080, %v1080
  %v1087 = vunpack.c.l.b16 %v1024
  %v1088 = vunpack.c.h.b16 %v1024
  %v1089 = vunpack.c.l.b16 %v1025
  %v1090 = vunpack.c.h.b16 %v1025
  %v1091 = vpack.c.b16 %v1087, %v1087
  %v1092 = vpack.c.b16 %v1088, %v1088
  %v1093 = vpack.c.b16 %v1089, %v1089
  %v1094 = vpack.c.b16 %v1090, %v1090
  %v1097 = vunpack.c.l.b16 %v1038
  %v1098 = vunpack.c.h.b16 %v1038
  %v1099 = vunpack.c.l.b16 %v1039
  %v1100 = vunpack.c.h.b16 %v1039
  %v1101 = vpack.c.b16 %v1097, %v1097
  %v1102 = vpack.c.b16 %v1098, %v1098
  %v1103 = vpack.c.b16 %v1099, %v1099
  %v1104 = vpack.c.b16 %v1100, %v1100
  %v1107 = vunpack.c.l.b16 %v1053
  %v1108 = vunpack.c.h.b16 %v1053
  %v1109 = vunpack.c.l.b16 %v1054
  %v1110 = vunpack.c.h.b16 %v1054
  %v1111 = vpack.c.b16 %v1107, %v1107
  %v1112 = vpack.c.b16 %v1108, %v1108
  %v1113 = vpack.c.b16 %v1109, %v1109
  %v1114 = vpack.c.b16 %v1110, %v1110
  %v1117 = vsel %vm326, %v1061, %v1071
  %v1121 = vsel %vm326, %v1062, %v1072
  %v1125 = vsel %vm326, %v1063, %v1073
  %v1129 = vsel %vm326, %v1064, %v1074
  %v1133 = vsel %vm326, %v1081, %v1091
  %v1137 = vsel %vm326, %v1082, %v1092
  %v1141 = vsel %vm326, %v1083, %v1093
  %v1145 = vsel %vm326, %v1084, %v1094
  %v1149 = vsel %vm326, %v1101, %v1111
  %v1153 = vsel %vm326, %v1102, %v1112
  %v1157 = vsel %vm326, %v1103, %v1113
  %v1161 = vsel %vm326, %v1104, %v1114
  %v1163 = vld [vmem:[%s8] sm:$0xf]
  %v1164 = vld [vmem:[%s9] sm:$0xff]
  %1166 = vset.pattern.permute.xlu0 0
  %1167 = vperm.xlu0 %1166, %v1164
  %v1168 = vpop.permute.xlu0 %1167
  %vm1170 = vcmask 392192
  %v1172 = vsel %vm1170, %v1163, 0
  %1174 = vmatpush.bf16.msra.mxu0 0
  %1175 = vmatpush.bf16.msra.mxu0 0
  %1176 = vmatpush.bf16.msra.mxu0 0
  %1177 = vmatpush.bf16.msra.mxu0 0
  %1178 = vmatpush.bf16.msra.mxu0 0
  %1179 = vmatpush.bf16.msra.mxu0 %v1149
  %1180 = vmatpush.bf16.msra.mxu0 %v1133
  %1181 = vmatpush.bf16.msra.mxu0 %v1117
  %1182 = vmatmul.bf16.gmra.mxu0 %v1172
  %v1183 = vpop.f32.mrf.mxu0
  %v1184 = vadd.f32 %v1168, %v1183
  %v1185 = vpop.f32.mrf.mxu0
  %1186 = vdwg.mxu0
  %1187 = vmatpush.bf16.msra.mxu0 0
  %1188 = vmatpush.bf16.msra.mxu0 0
  %1189 = vmatpush.bf16.msra.mxu0 0
  %1190 = vmatpush.bf16.msra.mxu0 0
  %1191 = vmatpush.bf16.msra.mxu0 0
  %1192 = vmatpush.bf16.msra.mxu0 %v1153
  %1193 = vmatpush.bf16.msra.mxu0 %v1137
  %1194 = vmatpush.bf16.msra.mxu0 %v1121
  %1195 = vmatmul.bf16.gmra.mxu0 %v1172
  %v1196 = vpop.f32.mrf.mxu0
  %v1197 = vadd.f32 %v1168, %v1196
  %v1198 = vpop.f32.mrf.mxu0
  %1199 = vdwg.mxu0
  %1200 = vmatpush.bf16.msra.mxu0 0
  %1201 = vmatpush.bf16.msra.mxu0 0
  %1202 = vmatpush.bf16.msra.mxu0 0
  %1203 = vmatpush.bf16.msra.mxu0 0
  %1204 = vmatpush.bf16.msra.mxu0 0
  %1205 = vmatpush.bf16.msra.mxu0 %v1157
  %1206 = vmatpush.bf16.msra.mxu0 %v1141
  %1207 = vmatpush.bf16.msra.mxu0 %v1125
  %1208 = vmatmul.bf16.gmra.mxu0 %v1172
  %v1209 = vpop.f32.mrf.mxu0
  %v1210 = vadd.f32 %v1168, %v1209
  %v1211 = vpop.f32.mrf.mxu0
  %1212 = vdwg.mxu0
  %1213 = vmatpush.bf16.msra.mxu0 0
  %1214 = vmatpush.bf16.msra.mxu0 0
  %1215 = vmatpush.bf16.msra.mxu0 0
  %1216 = vmatpush.bf16.msra.mxu0 0
  %1217 = vmatpush.bf16.msra.mxu0 0
  %1218 = vmatpush.bf16.msra.mxu0 %v1161
  %1219 = vmatpush.bf16.msra.mxu0 %v1145
  %1220 = vmatpush.bf16.msra.mxu0 %v1129
  %1221 = vmatmul.bf16.gmra.mxu0 %v1172
  %v1222 = vpop.f32.mrf.mxu0
  %v1223 = vadd.f32 %v1168, %v1222
  %v1224 = vpop.f32.mrf.mxu0
  %1225 = vdwg.mxu0
  %v1226 = vld [vmem:[%s10] sm:$0xff]
  %v1227 = vld [vmem:[%s10 + $0x8] sm:$0xff]
  %v1228 = vld [vmem:[%s10 + $0x10] sm:$0xff]
  %v1229 = vld [vmem:[%s10 + $0x18] sm:$0xff]
  %v1230 = vadd.f32 %v1184, %v1226
  %v1231 = vadd.f32 %v1197, %v1227
  %v1232 = vadd.f32 %v1210, %v1228
  %v1233 = vadd.f32 %v1223, %v1229
  %vm1234 = vcmp.gt.f32.partialorder %v1230, 0.0
  %vm1235 = vcmp.gt.f32.partialorder %v1231, 0.0
  %vm1236 = vcmp.gt.f32.partialorder %v1232, 0.0
  %vm1237 = vcmp.gt.f32.partialorder %v1233, 0.0
  %v1238 = vmin.f32 %v1230, 0.0
  %v1239 = vmin.f32 %v1231, 0.0
  %v1240 = vmin.f32 %v1232, 0.0
  %v1241 = vmin.f32 %v1233, 0.0
  %v1242 = vmul.f32 %v1238, 1.442695
  %v1243 = vpow.pop %v1242
  %v1244 = vmul.f32 %v1239, 1.442695
  %v1245 = vpow.pop %v1244
  %v1246 = vmul.f32 %v1240, 1.442695
  %v1247 = vpow.pop %v1246
  %v1248 = vmul.f32 %v1241, 1.442695
  %v1249 = vpow.pop %v1248
  %v1250 = vsub.f32 %v1243, 1.0
  %v1251 = vsub.f32 %v1245, 1.0
  %v1252 = vsub.f32 %v1247, 1.0
  %v1253 = vsub.f32 %v1249, 1.0
  %v1254 = vsel %vm1234, %v1230, %v1250
  %v1255 = vsel %vm1235, %v1231, %v1251
  %v1256 = vsel %vm1236, %v1232, %v1252
  %v1257 = vsel %vm1237, %v1233, %v1253
  %1258 = vst [vmem:[%s11] sm:$0xff] %v1254
  %1259 = vst [vmem:[%s11 + $0x8] sm:$0xff] %v1255
  %1260 = vst [vmem:[%s11 + $0x10] sm:$0xff] %v1256
  %1261 = vst [vmem:[%s11 + $0x18] sm:$0xff] %v1257
  // Predicated region
  $region46: #{_endblock_forward.1} parent=0 // pred_check
    _
  $region47: #{_endblock_forward.1} parent=0 // pred_check_branch
    %1263 = sbr.rel (0) target = $region49
  $region48: #{_endblock_forward.1} parent=0 // pred_region
    _
  $region49: #{_endblock_forward.1} parent=0 // pred_fallthru
    _
  // Predicated region
  $region50: #{_endblock_forward.1} parent=0 // pred_check
    _
  $region51: #{_endblock_forward.1} parent=0 // pred_check_branch
    %1265 = sbr.rel (0) target = $region53
  $region52: #{_endblock_forward.1} parent=0 // pred_region
    _
  $region53: #{_endblock_forward.1} parent=0 // pred_fallthru
    _

</llo_original>
